<compile_context>
chip_gen: v5e
topology: v5e:2x2
jax: 0.10.0
libtpu: 0.0.40
codegen_flags: <defaults>
</compile_context>

<pallas_src>
import jax
import jax.numpy as jnp
from jax.experimental import pallas as pl
from jax.experimental.pallas import tpu as pltpu

NAN_EPS = 1e-7       # MLP.eps used as nan_to_num replacement value
BN_EPS = 1e-5        # nn.BatchNorm1d default eps
LRELU_SLOPE = 0.01   # nn.LeakyReLU default negative_slope
F32_MAX = float(jnp.finfo(jnp.float32).max)
F32_MIN = float(jnp.finfo(jnp.float32).min)


def _nan_to_num(y):
    # clip handles +/-inf in one select pair (NaN passes through clip), then one
    # NaN-select — two VPU select chains instead of three.
    y = jnp.clip(y, F32_MIN, F32_MAX)
    return jnp.where(jnp.isnan(y), jnp.float32(NAN_EPS), y)


def mlp_vae_encoder_kernel(
    x_ref,
    w1_ref, b1_ref, g1_ref, be1_ref,
    w2_ref, b2_ref, g2_ref, be2_ref,
    w3_ref, b3_ref, g3_ref, be3_ref,
    wml_ref, bml_ref,          # fused [mu | logvar] weight / bias
    noise_ref,
    mu_ref, logvar_ref, z_ref,
):
    inv_b = jnp.float32(1.0 / x_ref.shape[0])

    def enc_block(h, w_ref, b_ref, g_ref, be_ref):
        # Linear (MXU) + nan_to_num + LeakyReLU + BatchNorm1d (batch stats, 1-pass)
        y = jnp.dot(h, w_ref[...], preferred_element_type=jnp.float32) + b_ref[...]
        y = _nan_to_num(y)
        y = jnp.where(y >= 0, y, LRELU_SLOPE * y)
        mean = jnp.sum(y, axis=0, keepdims=True) * inv_b
        mean_sq = jnp.sum(y * y, axis=0, keepdims=True) * inv_b
        var = jnp.maximum(mean_sq - mean * mean, 0.0)   # biased variance, one pass
        y = (y - mean) * jax.lax.rsqrt(var + BN_EPS)
        return y * g_ref[...] + be_ref[...]

    h = x_ref[...]
    h = enc_block(h, w1_ref, b1_ref, g1_ref, be1_ref)
    h = enc_block(h, w2_ref, b2_ref, g2_ref, be2_ref)
    h = enc_block(h, w3_ref, b3_ref, g3_ref, be3_ref)

    # Single fused MXU pass for mu and logvar (lane-dense N = 2*latent output).
    latent = mu_ref.shape[-1]
    y = jnp.dot(h, wml_ref[...], preferred_element_type=jnp.float32) + bml_ref[...]
    mu = y[:, :latent]
    lv = y[:, latent:]

    mu_ref[...] = mu
    logvar_ref[...] = lv
    # sampling: z = mu + eps_noise * exp(0.5 * logvar)
    z_ref[...] = mu + noise_ref[...] * jnp.exp(0.5 * lv)


def make_params(key, in_dcg, hidden, latent_size):
    """Deterministic synthetic parameters (PyTorch-Linear-style, stored as (in, out))."""
    dims = [
        (in_dcg, hidden[0]),
        (hidden[0], hidden[2]),
        (hidden[2], hidden[4]),
        (hidden[4], latent_size),   # fc_mu
        (hidden[4], latent_size),   # fc_logvar
    ]
    params = {}
    names = ["enc1", "enc2", "enc3", "fc_mu", "fc_logvar"]
    for name, (fin, fout) in zip(names, dims):
        key, kw, kb = jax.random.split(key, 3)
        bound = 1.0 / float(jnp.sqrt(jnp.float32(fin)))
        params[f"{name}_w"] = jax.random.uniform(
            kw, (fin, fout), jnp.float32, -bound, bound)
        params[f"{name}_b"] = jax.random.uniform(
            kb, (1, fout), jnp.float32, -bound, bound)
    for name, f in zip(["bn1", "bn2", "bn3"], [hidden[0], hidden[2], hidden[4]]):
        params[f"{name}_g"] = jnp.ones((1, f), jnp.float32)
        params[f"{name}_b"] = jnp.zeros((1, f), jnp.float32)
    return params


def _pad_lanes(a, target, axis):
    """Zero-pad `axis` of `a` up to `target` lanes."""
    cur = a.shape[axis]
    if cur == target:
        return a
    pad = [(0, 0)] * a.ndim
    pad[axis] = (0, target - cur)
    return jnp.pad(a, pad)


def prepare_kernel_params(params, hidden, latent_size):
    """Pad hidden[4] -> multiple of 128 lanes and fuse fc_mu / fc_logvar weights."""
    h4 = hidden[4]
    h4p = ((h4 + 127) // 128) * 128   # lane-dense padded width (64 -> 128)

    kp = dict(params)
    # enc3 output columns + bias padded with zeros.
    kp["enc3_w"] = _pad_lanes(params["enc3_w"], h4p, axis=1)
    kp["enc3_b"] = _pad_lanes(params["enc3_b"], h4p, axis=1)
    # Padded BN lanes: gamma = 0 (NOT 1) and beta = 0 so padded columns stay exactly 0.
    kp["bn3_g"] = _pad_lanes(params["bn3_g"], h4p, axis=1)
    kp["bn3_b"] = _pad_lanes(params["bn3_b"], h4p, axis=1)
    # Fused [mu | logvar] weight: pad input rows with zeros, concat along output lanes.
    wmu = _pad_lanes(params["fc_mu_w"], h4p, axis=0)
    wlv = _pad_lanes(params["fc_logvar_w"], h4p, axis=0)
    kp["fc_mulv_w"] = jnp.concatenate([wmu, wlv], axis=1)          # (h4p, 2*latent)
    kp["fc_mulv_b"] = jnp.concatenate(
        [params["fc_mu_b"], params["fc_logvar_b"]], axis=1)        # (1, 2*latent)
    return kp


def mlp_vae_forward(x, params, noise, in_dcg, hidden, latent_size):
    x2d = x.reshape(-1, in_dcg).astype(jnp.float32)     # x.view(-1, in_dcg)
    B = x2d.shape[0]

    kp = prepare_kernel_params(params, hidden, latent_size)

    args = (
        x2d,
        kp["enc1_w"], kp["enc1_b"], kp["bn1_g"], kp["bn1_b"],
        kp["enc2_w"], kp["enc2_b"], kp["bn2_g"], kp["bn2_b"],
        kp["enc3_w"], kp["enc3_b"], kp["bn3_g"], kp["bn3_b"],
        kp["fc_mulv_w"], kp["fc_mulv_b"],
        noise,
    )

    vmem_spec = pl.BlockSpec(memory_space=pltpu.MemorySpace.VMEM)
    out_shape = jax.ShapeDtypeStruct((B, latent_size), jnp.float32)

    mu, logvar, z = pl.pallas_call(
        mlp_vae_encoder_kernel,
        out_shape=(out_shape, out_shape, out_shape),
        in_specs=[vmem_spec] * len(args),
        out_specs=(vmem_spec, vmem_spec, vmem_spec),
        # Footprint < 1.5 MiB: leave plenty of scoped-VMEM headroom (v7x has only
        # 64 MiB physical per TC — never request all of it).
        compiler_params=pltpu.CompilerParams(vmem_limit_bytes=8 << 20),
    )(*args)
    return mu, logvar, z


def reference_forward(x, params, noise, in_dcg):
    """Pure-JAX reference (unpadded, unfused) for correctness checking."""
    h = x.reshape(-1, in_dcg).astype(jnp.float32)

    def block(h, w, b, g, be):
        y = h @ w + b
        y = jnp.nan_to_num(y, nan=NAN_EPS)
        y = jnp.where(y >= 0, y, LRELU_SLOPE * y)
        mean = jnp.mean(y, axis=0, keepdims=True)
        var = jnp.mean((y - mean) ** 2, axis=0, keepdims=True)
        return (y - mean) / jnp.sqrt(var + BN_EPS) * g + be

    h = block(h, params["enc1_w"], params["enc1_b"], params["bn1_g"], params["bn1_b"])
    h = block(h, params["enc2_w"], params["enc2_b"], params["bn2_g"], params["bn2_b"])
    h = block(h, params["enc3_w"], params["enc3_b"], params["bn3_g"], params["bn3_b"])
    mu = h @ params["fc_mu_w"] + params["fc_mu_b"]
    lv = h @ params["fc_logvar_w"] + params["fc_logvar_b"]
    z = mu + noise * jnp.exp(0.5 * lv)
    return mu, lv, z


if __name__ == "__main__":
    # Small shapes consistent with the module structure (all lane dims multiples of 128
    # after padding): in_dcg=512, hidden=[256, 192, 128, 96, 64], latent=128, batch=8.
    IN_DCG = 512
    HIDDEN = [256, 192, 128, 96, 64]
    LATENT = 128
    B = 8

    key = jax.random.PRNGKey(0)
    kx, kp_key, kn = jax.random.split(key, 3)

    x = jax.random.normal(kx, (B, IN_DCG), jnp.float32)
    params = make_params(kp_key, IN_DCG, HIDDEN, LATENT)
    # torch.randn_like(std) — deterministic noise generated outside the kernel.
    noise = jax.random.normal(kn, (B, LATENT), jnp.float32)

    mu, logvar, z = mlp_vae_forward(x, params, noise, IN_DCG, HIDDEN, LATENT)
    jax.block_until_ready((mu, logvar, z))

    mu_r, lv_r, z_r = reference_forward(x, params, noise, IN_DCG)
    assert jnp.allclose(mu, mu_r, atol=2e-4, rtol=2e-4)
    assert jnp.allclose(logvar, lv_r, atol=2e-4, rtol=2e-4)
    assert jnp.allclose(z, z_r, atol=2e-4, rtol=2e-4)

    print("KERNEL_OK")
</pallas_src>

<mosaic_0001>
module attributes {stable_mosaic.version = 11 : i64} {
  func.func @mlp_vae_encoder_kernel(%arg0: memref<8x512xf32, #tpu.memory_space<vmem>>, %arg1: memref<512x256xf32, #tpu.memory_space<vmem>>, %arg2: memref<1x256xf32, #tpu.memory_space<vmem>>, %arg3: memref<1x256xf32, #tpu.memory_space<vmem>>, %arg4: memref<1x256xf32, #tpu.memory_space<vmem>>, %arg5: memref<256x128xf32, #tpu.memory_space<vmem>>, %arg6: memref<1x128xf32, #tpu.memory_space<vmem>>, %arg7: memref<1x128xf32, #tpu.memory_space<vmem>>, %arg8: memref<1x128xf32, #tpu.memory_space<vmem>>, %arg9: memref<128x128xf32, #tpu.memory_space<vmem>>, %arg10: memref<1x128xf32, #tpu.memory_space<vmem>>, %arg11: memref<1x128xf32, #tpu.memory_space<vmem>>, %arg12: memref<1x128xf32, #tpu.memory_space<vmem>>, %arg13: memref<128x256xf32, #tpu.memory_space<vmem>>, %arg14: memref<1x256xf32, #tpu.memory_space<vmem>>, %arg15: memref<8x128xf32, #tpu.memory_space<vmem>>, %arg16: memref<8x128xf32, #tpu.memory_space<vmem>>, %arg17: memref<8x128xf32, #tpu.memory_space<vmem>>, %arg18: memref<8x128xf32, #tpu.memory_space<vmem>>) attributes {dimension_semantics = [], scalar_prefetch = 0 : i64, scratch_operands = 0 : i64, tpu.core_type = #tpu.core_type<tc>} {
    %c0 = arith.constant 0 : index
    %c0_0 = arith.constant 0 : index
    %0 = vector.load %arg0[%c0, %c0_0] : memref<8x512xf32, #tpu.memory_space<vmem>>, vector<8x512xf32>
    %c0_1 = arith.constant 0 : index
    %c0_2 = arith.constant 0 : index
    %1 = vector.load %arg1[%c0_1, %c0_2] : memref<512x256xf32, #tpu.memory_space<vmem>>, vector<512x256xf32>
    %cst = arith.constant dense<0.000000e+00> : vector<8x256xf32>
    %2 = tpu.matmul %0, %1, %cst {dimension_numbers = #tpu.dot_dimension_numbers<[1], [0], [0], [1], [0, 0, 1, 1], [], []>} : vector<8x512xf32>, vector<512x256xf32>, vector<8x256xf32> -> vector<8x256xf32>
    %c0_3 = arith.constant 0 : index
    %c0_4 = arith.constant 0 : index
    %3 = vector.load %arg2[%c0_3, %c0_4] : memref<1x256xf32, #tpu.memory_space<vmem>>, vector<1x256xf32>
    %4 = vector.broadcast %3 : vector<1x256xf32> to vector<8x256xf32>
    %5 = arith.addf %2, %4 : vector<8x256xf32>
    %cst_5 = arith.constant -3.40282347E+38 : f32
    %cst_6 = arith.constant 3.40282347E+38 : f32
    %6 = vector.broadcast %cst_5 : f32 to vector<8x256xf32>
    %7 = arith.maximumf %6, %5 : vector<8x256xf32>
    %8 = vector.broadcast %cst_6 : f32 to vector<8x256xf32>
    %9 = arith.minimumf %8, %7 : vector<8x256xf32>
    %10 = arith.cmpf one, %9, %9 : vector<8x256xf32>
    %cst_7 = arith.constant 1.000000e-07 : f32
    %11 = vector.broadcast %cst_7 : f32 to vector<8x256xf32>
    %12 = arith.select %10, %11, %9 : vector<8x256xi1>, vector<8x256xf32>
    %cst_8 = arith.constant 0.000000e+00 : f32
    %13 = vector.broadcast %cst_8 : f32 to vector<8x256xf32>
    %14 = arith.cmpf oge, %12, %13 : vector<8x256xf32>
    %cst_9 = arith.constant 0.00999999977 : f32
    %15 = vector.broadcast %cst_9 : f32 to vector<8x256xf32>
    %16 = arith.mulf %15, %12 : vector<8x256xf32>
    %17 = arith.select %14, %12, %16 : vector<8x256xi1>, vector<8x256xf32>
    %cst_10 = arith.constant dense<0.000000e+00> : vector<256xf32>
    %18 = vector.multi_reduction <add>, %17, %cst_10 [0] : vector<8x256xf32> to vector<256xf32>
    %19 = vector.shape_cast %18 : vector<256xf32> to vector<1x256xf32>
    %cst_11 = arith.constant 1.250000e-01 : f32
    %20 = vector.broadcast %cst_11 : f32 to vector<1x256xf32>
    %21 = arith.mulf %19, %20 : vector<1x256xf32>
    %22 = arith.mulf %17, %17 : vector<8x256xf32>
    %cst_12 = arith.constant dense<0.000000e+00> : vector<256xf32>
    %23 = vector.multi_reduction <add>, %22, %cst_12 [0] : vector<8x256xf32> to vector<256xf32>
    %24 = vector.shape_cast %23 : vector<256xf32> to vector<1x256xf32>
    %cst_13 = arith.constant 1.250000e-01 : f32
    %25 = vector.broadcast %cst_13 : f32 to vector<1x256xf32>
    %26 = arith.mulf %24, %25 : vector<1x256xf32>
    %27 = arith.mulf %21, %21 : vector<1x256xf32>
    %28 = arith.subf %26, %27 : vector<1x256xf32>
    %cst_14 = arith.constant 0.000000e+00 : f32
    %29 = vector.broadcast %cst_14 : f32 to vector<1x256xf32>
    %30 = arith.maximumf %28, %29 : vector<1x256xf32>
    %31 = vector.broadcast %21 : vector<1x256xf32> to vector<8x256xf32>
    %32 = arith.subf %17, %31 : vector<8x256xf32>
    %cst_15 = arith.constant 9.99999974E-6 : f32
    %33 = vector.broadcast %cst_15 : f32 to vector<1x256xf32>
    %34 = arith.addf %30, %33 : vector<1x256xf32>
    %35 = math.rsqrt %34 : vector<1x256xf32>
    %36 = vector.broadcast %35 : vector<1x256xf32> to vector<8x256xf32>
    %37 = arith.mulf %32, %36 : vector<8x256xf32>
    %c0_16 = arith.constant 0 : index
    %c0_17 = arith.constant 0 : index
    %38 = vector.load %arg3[%c0_16, %c0_17] : memref<1x256xf32, #tpu.memory_space<vmem>>, vector<1x256xf32>
    %39 = vector.broadcast %38 : vector<1x256xf32> to vector<8x256xf32>
    %40 = arith.mulf %37, %39 : vector<8x256xf32>
    %c0_18 = arith.constant 0 : index
    %c0_19 = arith.constant 0 : index
    %41 = vector.load %arg4[%c0_18, %c0_19] : memref<1x256xf32, #tpu.memory_space<vmem>>, vector<1x256xf32>
    %42 = vector.broadcast %41 : vector<1x256xf32> to vector<8x256xf32>
    %43 = arith.addf %40, %42 : vector<8x256xf32>
    %c0_20 = arith.constant 0 : index
    %c0_21 = arith.constant 0 : index
    %44 = vector.load %arg5[%c0_20, %c0_21] : memref<256x128xf32, #tpu.memory_space<vmem>>, vector<256x128xf32>
    %cst_22 = arith.constant dense<0.000000e+00> : vector<8x128xf32>
    %45 = tpu.matmul %43, %44, %cst_22 {dimension_numbers = #tpu.dot_dimension_numbers<[1], [0], [0], [1], [0, 0, 1, 1], [], []>} : vector<8x256xf32>, vector<256x128xf32>, vector<8x128xf32> -> vector<8x128xf32>
    %c0_23 = arith.constant 0 : index
    %c0_24 = arith.constant 0 : index
    %46 = vector.load %arg6[%c0_23, %c0_24] : memref<1x128xf32, #tpu.memory_space<vmem>>, vector<1x128xf32>
    %47 = vector.broadcast %46 : vector<1x128xf32> to vector<8x128xf32>
    %48 = arith.addf %45, %47 : vector<8x128xf32>
    %cst_25 = arith.constant -3.40282347E+38 : f32
    %cst_26 = arith.constant 3.40282347E+38 : f32
    %49 = vector.broadcast %cst_25 : f32 to vector<8x128xf32>
    %50 = arith.maximumf %49, %48 : vector<8x128xf32>
    %51 = vector.broadcast %cst_26 : f32 to vector<8x128xf32>
    %52 = arith.minimumf %51, %50 : vector<8x128xf32>
    %53 = arith.cmpf one, %52, %52 : vector<8x128xf32>
    %cst_27 = arith.constant 1.000000e-07 : f32
    %54 = vector.broadcast %cst_27 : f32 to vector<8x128xf32>
    %55 = arith.select %53, %54, %52 : vector<8x128xi1>, vector<8x128xf32>
    %cst_28 = arith.constant 0.000000e+00 : f32
    %56 = vector.broadcast %cst_28 : f32 to vector<8x128xf32>
    %57 = arith.cmpf oge, %55, %56 : vector<8x128xf32>
    %cst_29 = arith.constant 0.00999999977 : f32
    %58 = vector.broadcast %cst_29 : f32 to vector<8x128xf32>
    %59 = arith.mulf %58, %55 : vector<8x128xf32>
    %60 = arith.select %57, %55, %59 : vector<8x128xi1>, vector<8x128xf32>
    %cst_30 = arith.constant dense<0.000000e+00> : vector<128xf32>
    %61 = vector.multi_reduction <add>, %60, %cst_30 [0] : vector<8x128xf32> to vector<128xf32>
    %62 = vector.shape_cast %61 : vector<128xf32> to vector<1x128xf32>
    %cst_31 = arith.constant 1.250000e-01 : f32
    %63 = vector.broadcast %cst_31 : f32 to vector<1x128xf32>
    %64 = arith.mulf %62, %63 : vector<1x128xf32>
    %65 = arith.mulf %60, %60 : vector<8x128xf32>
    %cst_32 = arith.constant dense<0.000000e+00> : vector<128xf32>
    %66 = vector.multi_reduction <add>, %65, %cst_32 [0] : vector<8x128xf32> to vector<128xf32>
    %67 = vector.shape_cast %66 : vector<128xf32> to vector<1x128xf32>
    %cst_33 = arith.constant 1.250000e-01 : f32
    %68 = vector.broadcast %cst_33 : f32 to vector<1x128xf32>
    %69 = arith.mulf %67, %68 : vector<1x128xf32>
    %70 = arith.mulf %64, %64 : vector<1x128xf32>
    %71 = arith.subf %69, %70 : vector<1x128xf32>
    %cst_34 = arith.constant 0.000000e+00 : f32
    %72 = vector.broadcast %cst_34 : f32 to vector<1x128xf32>
    %73 = arith.maximumf %71, %72 : vector<1x128xf32>
    %74 = vector.broadcast %64 : vector<1x128xf32> to vector<8x128xf32>
    %75 = arith.subf %60, %74 : vector<8x128xf32>
    %cst_35 = arith.constant 9.99999974E-6 : f32
    %76 = vector.broadcast %cst_35 : f32 to vector<1x128xf32>
    %77 = arith.addf %73, %76 : vector<1x128xf32>
    %78 = math.rsqrt %77 : vector<1x128xf32>
    %79 = vector.broadcast %78 : vector<1x128xf32> to vector<8x128xf32>
    %80 = arith.mulf %75, %79 : vector<8x128xf32>
    %c0_36 = arith.constant 0 : index
    %c0_37 = arith.constant 0 : index
    %81 = vector.load %arg7[%c0_36, %c0_37] : memref<1x128xf32, #tpu.memory_space<vmem>>, vector<1x128xf32>
    %82 = vector.broadcast %81 : vector<1x128xf32> to vector<8x128xf32>
    %83 = arith.mulf %80, %82 : vector<8x128xf32>
    %c0_38 = arith.constant 0 : index
    %c0_39 = arith.constant 0 : index
    %84 = vector.load %arg8[%c0_38, %c0_39] : memref<1x128xf32, #tpu.memory_space<vmem>>, vector<1x128xf32>
    %85 = vector.broadcast %84 : vector<1x128xf32> to vector<8x128xf32>
    %86 = arith.addf %83, %85 : vector<8x128xf32>
    %c0_40 = arith.constant 0 : index
    %c0_41 = arith.constant 0 : index
    %87 = vector.load %arg9[%c0_40, %c0_41] : memref<128x128xf32, #tpu.memory_space<vmem>>, vector<128x128xf32>
    %cst_42 = arith.constant dense<0.000000e+00> : vector<8x128xf32>
    %88 = tpu.matmul %86, %87, %cst_42 {dimension_numbers = #tpu.dot_dimension_numbers<[1], [0], [0], [1], [0, 0, 1, 1], [], []>} : vector<8x128xf32>, vector<128x128xf32>, vector<8x128xf32> -> vector<8x128xf32>
    %c0_43 = arith.constant 0 : index
    %c0_44 = arith.constant 0 : index
    %89 = vector.load %arg10[%c0_43, %c0_44] : memref<1x128xf32, #tpu.memory_space<vmem>>, vector<1x128xf32>
    %90 = vector.broadcast %89 : vector<1x128xf32> to vector<8x128xf32>
    %91 = arith.addf %88, %90 : vector<8x128xf32>
    %cst_45 = arith.constant -3.40282347E+38 : f32
    %cst_46 = arith.constant 3.40282347E+38 : f32
    %92 = vector.broadcast %cst_45 : f32 to vector<8x128xf32>
    %93 = arith.maximumf %92, %91 : vector<8x128xf32>
    %94 = vector.broadcast %cst_46 : f32 to vector<8x128xf32>
    %95 = arith.minimumf %94, %93 : vector<8x128xf32>
    %96 = arith.cmpf one, %95, %95 : vector<8x128xf32>
    %cst_47 = arith.constant 1.000000e-07 : f32
    %97 = vector.broadcast %cst_47 : f32 to vector<8x128xf32>
    %98 = arith.select %96, %97, %95 : vector<8x128xi1>, vector<8x128xf32>
    %cst_48 = arith.constant 0.000000e+00 : f32
    %99 = vector.broadcast %cst_48 : f32 to vector<8x128xf32>
    %100 = arith.cmpf oge, %98, %99 : vector<8x128xf32>
    %cst_49 = arith.constant 0.00999999977 : f32
    %101 = vector.broadcast %cst_49 : f32 to vector<8x128xf32>
    %102 = arith.mulf %101, %98 : vector<8x128xf32>
    %103 = arith.select %100, %98, %102 : vector<8x128xi1>, vector<8x128xf32>
    %cst_50 = arith.constant dense<0.000000e+00> : vector<128xf32>
    %104 = vector.multi_reduction <add>, %103, %cst_50 [0] : vector<8x128xf32> to vector<128xf32>
    %105 = vector.shape_cast %104 : vector<128xf32> to vector<1x128xf32>
    %cst_51 = arith.constant 1.250000e-01 : f32
    %106 = vector.broadcast %cst_51 : f32 to vector<1x128xf32>
    %107 = arith.mulf %105, %106 : vector<1x128xf32>
    %108 = arith.mulf %103, %103 : vector<8x128xf32>
    %cst_52 = arith.constant dense<0.000000e+00> : vector<128xf32>
    %109 = vector.multi_reduction <add>, %108, %cst_52 [0] : vector<8x128xf32> to vector<128xf32>
    %110 = vector.shape_cast %109 : vector<128xf32> to vector<1x128xf32>
    %cst_53 = arith.constant 1.250000e-01 : f32
    %111 = vector.broadcast %cst_53 : f32 to vector<1x128xf32>
    %112 = arith.mulf %110, %111 : vector<1x128xf32>
    %113 = arith.mulf %107, %107 : vector<1x128xf32>
    %114 = arith.subf %112, %113 : vector<1x128xf32>
    %cst_54 = arith.constant 0.000000e+00 : f32
    %115 = vector.broadcast %cst_54 : f32 to vector<1x128xf32>
    %116 = arith.maximumf %114, %115 : vector<1x128xf32>
    %117 = vector.broadcast %107 : vector<1x128xf32> to vector<8x128xf32>
    %118 = arith.subf %103, %117 : vector<8x128xf32>
    %cst_55 = arith.constant 9.99999974E-6 : f32
    %119 = vector.broadcast %cst_55 : f32 to vector<1x128xf32>
    %120 = arith.addf %116, %119 : vector<1x128xf32>
    %121 = math.rsqrt %120 : vector<1x128xf32>
    %122 = vector.broadcast %121 : vector<1x128xf32> to vector<8x128xf32>
    %123 = arith.mulf %118, %122 : vector<8x128xf32>
    %c0_56 = arith.constant 0 : index
    %c0_57 = arith.constant 0 : index
    %124 = vector.load %arg11[%c0_56, %c0_57] : memref<1x128xf32, #tpu.memory_space<vmem>>, vector<1x128xf32>
    %125 = vector.broadcast %124 : vector<1x128xf32> to vector<8x128xf32>
    %126 = arith.mulf %123, %125 : vector<8x128xf32>
    %c0_58 = arith.constant 0 : index
    %c0_59 = arith.constant 0 : index
    %127 = vector.load %arg12[%c0_58, %c0_59] : memref<1x128xf32, #tpu.memory_space<vmem>>, vector<1x128xf32>
    %128 = vector.broadcast %127 : vector<1x128xf32> to vector<8x128xf32>
    %129 = arith.addf %126, %128 : vector<8x128xf32>
    %c0_60 = arith.constant 0 : index
    %c0_61 = arith.constant 0 : index
    %130 = vector.load %arg13[%c0_60, %c0_61] : memref<128x256xf32, #tpu.memory_space<vmem>>, vector<128x256xf32>
    %cst_62 = arith.constant dense<0.000000e+00> : vector<8x256xf32>
    %131 = tpu.matmul %129, %130, %cst_62 {dimension_numbers = #tpu.dot_dimension_numbers<[1], [0], [0], [1], [0, 0, 1, 1], [], []>} : vector<8x128xf32>, vector<128x256xf32>, vector<8x256xf32> -> vector<8x256xf32>
    %c0_63 = arith.constant 0 : index
    %c0_64 = arith.constant 0 : index
    %132 = vector.load %arg14[%c0_63, %c0_64] : memref<1x256xf32, #tpu.memory_space<vmem>>, vector<1x256xf32>
    %133 = vector.broadcast %132 : vector<1x256xf32> to vector<8x256xf32>
    %134 = arith.addf %131, %133 : vector<8x256xf32>
    %135 = vector.extract_strided_slice %134 {offsets = [0, 0], sizes = [8, 128], strides = [1, 1]} : vector<8x256xf32> to vector<8x128xf32>
    %136 = vector.extract_strided_slice %134 {offsets = [0, 128], sizes = [8, 128], strides = [1, 1]} : vector<8x256xf32> to vector<8x128xf32>
    %c0_65 = arith.constant 0 : index
    %c0_66 = arith.constant 0 : index
    %137 = vector.load %arg16[%c0_65, %c0_66] : memref<8x128xf32, #tpu.memory_space<vmem>>, vector<8x128xf32>
    tpu.vector_store %arg16[%c0_65, %c0_66], %135 {strides = array<i32>} : memref<8x128xf32, #tpu.memory_space<vmem>>, vector<8x128xf32>,
    %c0_67 = arith.constant 0 : index
    %c0_68 = arith.constant 0 : index
    %138 = vector.load %arg17[%c0_67, %c0_68] : memref<8x128xf32, #tpu.memory_space<vmem>>, vector<8x128xf32>
    tpu.vector_store %arg17[%c0_67, %c0_68], %136 {strides = array<i32>} : memref<8x128xf32, #tpu.memory_space<vmem>>, vector<8x128xf32>,
    %c0_69 = arith.constant 0 : index
    %c0_70 = arith.constant 0 : index
    %139 = vector.load %arg15[%c0_69, %c0_70] : memref<8x128xf32, #tpu.memory_space<vmem>>, vector<8x128xf32>
    %cst_71 = arith.constant 5.000000e-01 : f32
    %140 = vector.broadcast %cst_71 : f32 to vector<8x128xf32>
    %141 = arith.mulf %140, %136 : vector<8x128xf32>
    %142 = math.exp %141 : vector<8x128xf32>
    %143 = arith.mulf %139, %142 : vector<8x128xf32>
    %144 = arith.addf %135, %143 : vector<8x128xf32>
    %c0_72 = arith.constant 0 : index
    %c0_73 = arith.constant 0 : index
    %145 = vector.load %arg18[%c0_72, %c0_73] : memref<8x128xf32, #tpu.memory_space<vmem>>, vector<8x128xf32>
    tpu.vector_store %arg18[%c0_72, %c0_73], %144 {strides = array<i32>} : memref<8x128xf32, #tpu.memory_space<vmem>>, vector<8x128xf32>,
    return
  }
}

</mosaic_0001>

<llo_original>
// kernel: tpu_custom_call.1
$region0: #{tpu_custom_call.1}
  #allocation0 [shape = 'u32[]', space=smem, size = 0x4, offset = 0x4, fixed_abs, tag = 'smem constant byte address 0x4 - core index']
  #allocation1 [shape = 'u32[72,128]{1,0:T(1,128)}', space=vmem, size = 0x9000, scoped, tag = 'internal scratch']
  %s0 = inlined_call_operand.hbm [shape: f32[8,512], index: 0, kind: input, shape index: {}]
  %s1 = inlined_call_operand.hbm [shape: f32[512,256], index: 1, kind: input, shape index: {}]
  %s2 = inlined_call_operand.hbm [shape: f32[1,256], index: 2, kind: input, shape index: {}]
  %s3 = inlined_call_operand.vmem [shape: f32[1,256], index: 3, kind: input, shape index: {}]
  %s4 = inlined_call_operand.hbm [shape: f32[1,256], index: 4, kind: input, shape index: {}]
  %s5 = inlined_call_operand.hbm [shape: f32[256,128], index: 5, kind: input, shape index: {}]
  %s6 = inlined_call_operand.vmem [shape: f32[1,128], index: 6, kind: input, shape index: {}]
  %s7 = inlined_call_operand.vmem [shape: f32[1,128], index: 7, kind: input, shape index: {}]
  %s8 = inlined_call_operand.hbm [shape: f32[1,128], index: 8, kind: input, shape index: {}]
  %s9 = inlined_call_operand.hbm [shape: f32[128,128], index: 9, kind: input, shape index: {}]
  %s10 = inlined_call_operand.hbm [shape: f32[1,128], index: 10, kind: input, shape index: {}]
  %s11 = inlined_call_operand.hbm [shape: f32[1,128], index: 11, kind: input, shape index: {}]
  %s12 = inlined_call_operand.hbm [shape: f32[1,128], index: 12, kind: input, shape index: {}]
  %s13 = inlined_call_operand.hbm [shape: f32[128,256], index: 13, kind: input, shape index: {}]
  %s14 = inlined_call_operand.vmem [shape: f32[1,256], index: 14, kind: input, shape index: {}]
  %s15 = inlined_call_operand.vmem [shape: f32[8,128], index: 15, kind: input, shape index: {}]
  %s16 = inlined_call_operand.hbm [shape: f32[8,128], index: 16, kind: output, shape index: {0}]
  %s17 = inlined_call_operand.hbm [shape: f32[8,128], index: 17, kind: output, shape index: {1}]
  %s18 = inlined_call_operand.hbm [shape: f32[8,128], index: 18, kind: output, shape index: {2}]
  %19 = xla_tuple %s16, %s17, %s18
  %s20 = sld [smem:[#allocation0]]
  $region134: #{tpu_custom_call.1} parent=0
    _
  %s22 = ssub.s32 1, %s20
  %s23 = scalar_select 0, %s22, %s20
  $region1: #{tpu_custom_call.1} parent=0
    #allocation2 [shape = 'u8[16384]{0}', space=vmem, size = 0x4000, scoped, tag = 'input window, operand 0, single buffered']
    #allocation3 [shape = 's32[1]{0}', space=sflag, size = 0x4, scoped, tag = 'scoped memory for tpu_custom_call.1']
    #allocation4 [shape = 's32[1]{0}', space=sflag, size = 0x4, scoped, tag = 'scoped memory for tpu_custom_call.1']
    #allocation5 [shape = 'u8[524288]{0}', space=vmem, size = 0x80000, scoped, tag = 'input window, operand 1, single buffered']
    #allocation6 [shape = 's32[1]{0}', space=sflag, size = 0x4, scoped, tag = 'scoped memory for tpu_custom_call.1']
    #allocation7 [shape = 'u8[1024]{0}', space=vmem, size = 0x400, scoped, tag = 'input window, operand 2, single buffered']
    #allocation8 [shape = 'u8[1024]{0}', space=vmem, size = 0x400, scoped, tag = 'input window, operand 4, single buffered']
    #allocation9 [shape = 's32[1]{0}', space=sflag, size = 0x4, scoped, tag = 'scoped memory for tpu_custom_call.1']
    #allocation10 [shape = 'u8[131072]{0}', space=vmem, size = 0x20000, scoped, tag = 'input window, operand 5, single buffered']
    #allocation11 [shape = 'u8[512]{0}', space=vmem, size = 0x400, scoped, tag = 'input window, operand 8, single buffered']
    #allocation12 [shape = 's32[1]{0}', space=sflag, size = 0x4, scoped, tag = 'scoped memory for tpu_custom_call.1']
    #allocation13 [shape = 'u8[65536]{0}', space=vmem, size = 0x10000, scoped, tag = 'input window, operand 9, single buffered']
    #allocation14 [shape = 'u8[512]{0}', space=vmem, size = 0x400, scoped, tag = 'input window, operand 10, single buffered']
    #allocation15 [shape = 's32[1]{0}', space=sflag, size = 0x4, scoped, tag = 'scoped memory for tpu_custom_call.1']
    #allocation16 [shape = 'u8[512]{0}', space=vmem, size = 0x400, scoped, tag = 'input window, operand 11, single buffered']
    #allocation17 [shape = 'u8[512]{0}', space=vmem, size = 0x400, scoped, tag = 'input window, operand 12, single buffered']
    #allocation18 [shape = 's32[1]{0}', space=sflag, size = 0x4, scoped, tag = 'scoped memory for tpu_custom_call.1']
    #allocation19 [shape = 'u8[131072]{0}', space=vmem, size = 0x20000, scoped, tag = 'input window, operand 13, single buffered']
    #allocation20 [shape = 'u8[4096]{0}', space=vmem, size = 0x1000, scoped, tag = 'output window, operand 0, single buffered']
    #allocation21 [shape = 'u8[4096]{0}', space=vmem, size = 0x1000, scoped, tag = 'output window, operand 1, single buffered']
    #allocation22 [shape = 's32[1]{0}', space=sflag, size = 0x4, scoped, tag = 'scoped memory for tpu_custom_call.1']
    #allocation23 [shape = 'u8[4096]{0}', space=vmem, size = 0x1000, scoped, tag = 'output window, operand 2, single buffered']
    %24 = vsyncpa [#allocation3], 0
    %25 = vsyncpa [#allocation6], 0
    %26 = vsyncpa [#allocation9], 0
    %27 = vsyncpa [#allocation12], 0
    %28 = vsyncpa [#allocation15], 0
    %29 = vsyncpa [#allocation18], 0
    %30 = vsyncpa [#allocation4], 0
    %31 = vsyncpa [#allocation22], 0
    // Predicated region
    $region2: #{tpu_custom_call.1} parent=1 // pred_check
      _
    $region3: #{tpu_custom_call.1} parent=1 // pred_check_branch
      %33 = sbr.rel (0) target = $region5
    $region4: #{tpu_custom_call.1} parent=1 // pred_region
      %35 = vsyncadd [#allocation3], 0
      %s37 = sshll.u32 %s0, 4
      %s38 = int_to_ptr.hbm [resolvable:$true] %s37
      %s39 = sshll.u32 [#allocation2], 4
      %s40 = int_to_ptr.vmem [resolvable:$true] %s39
      %42 = dma.hbm_to_vmem [thread:$0]  %s38, 512, %s40, [#allocation3]
    $region5: #{tpu_custom_call.1} parent=1 // pred_fallthru
      _
    // Predicated region
    $region6: #{tpu_custom_call.1} parent=1 // pred_check
      _
    $region7: #{tpu_custom_call.1} parent=1 // pred_check_branch
      %44 = sbr.rel (0) target = $region9
    $region8: #{tpu_custom_call.1} parent=1 // pred_region
      %46 = vsyncadd [#allocation6], 0
      %s47 = sshll.u32 %s1, 4
      %s48 = int_to_ptr.hbm [resolvable:$true] %s47
      %s49 = sshll.u32 [#allocation5], 4
      %s50 = int_to_ptr.vmem [resolvable:$true] %s49
      %55 = dma.hbm_to_vmem [thread:$0]  %s48, 16384, %s50, [#allocation6], 256, 256, 16
    $region9: #{tpu_custom_call.1} parent=1 // pred_fallthru
      _
    // Predicated region
    $region10: #{tpu_custom_call.1} parent=1 // pred_check
      _
    $region11: #{tpu_custom_call.1} parent=1 // pred_check_branch
      %57 = sbr.rel (0) target = $region13
    $region12: #{tpu_custom_call.1} parent=1 // pred_region
      %59 = vsyncadd [#allocation6], 0
      %s61 = sshll.u32 %s2, 4
      %s62 = int_to_ptr.hbm [resolvable:$true] %s61
      %s63 = sshll.u32 [#allocation7], 4
      %s64 = int_to_ptr.vmem [resolvable:$true] %s63
      %66 = dma.hbm_to_vmem [thread:$0]  %s62, 32, %s64, [#allocation6]
    $region13: #{tpu_custom_call.1} parent=1 // pred_fallthru
      _
    // Predicated region
    $region14: #{tpu_custom_call.1} parent=1 // pred_check
      _
    $region15: #{tpu_custom_call.1} parent=1 // pred_check_branch
      %68 = sbr.rel (0) target = $region17
    $region16: #{tpu_custom_call.1} parent=1 // pred_region
      _
    $region17: #{tpu_custom_call.1} parent=1 // pred_fallthru
      _
    // Predicated region
    $region18: #{tpu_custom_call.1} parent=1 // pred_check
      _
    $region19: #{tpu_custom_call.1} parent=1 // pred_check_branch
      %70 = sbr.rel (0) target = $region21
    $region20: #{tpu_custom_call.1} parent=1 // pred_region
      %72 = vsyncadd [#allocation9], 0
      %s74 = sshll.u32 %s4, 4
      %s75 = int_to_ptr.hbm [resolvable:$true] %s74
      %s76 = sshll.u32 [#allocation8], 4
      %s77 = int_to_ptr.vmem [resolvable:$true] %s76
      %79 = dma.hbm_to_vmem [thread:$0]  %s75, 32, %s77, [#allocation9]
    $region21: #{tpu_custom_call.1} parent=1 // pred_fallthru
      _
    // Predicated region
    $region22: #{tpu_custom_call.1} parent=1 // pred_check
      _
    $region23: #{tpu_custom_call.1} parent=1 // pred_check_branch
      %81 = sbr.rel (0) target = $region25
    $region24: #{tpu_custom_call.1} parent=1 // pred_region
      %83 = vsyncadd [#allocation9], 0
      %s84 = sshll.u32 %s5, 4
      %s85 = int_to_ptr.hbm [resolvable:$true] %s84
      %s86 = sshll.u32 [#allocation10], 4
      %s87 = int_to_ptr.vmem [resolvable:$true] %s86
      %92 = dma.hbm_to_vmem [thread:$0]  %s85, 4096, %s87, [#allocation9], 128, 128, 8
    $region25: #{tpu_custom_call.1} parent=1 // pred_fallthru
      _
    // Predicated region
    $region26: #{tpu_custom_call.1} parent=1 // pred_check
      _
    $region27: #{tpu_custom_call.1} parent=1 // pred_check_branch
      %94 = sbr.rel (0) target = $region29
    $region28: #{tpu_custom_call.1} parent=1 // pred_region
      _
    $region29: #{tpu_custom_call.1} parent=1 // pred_fallthru
      _
    // Predicated region
    $region30: #{tpu_custom_call.1} parent=1 // pred_check
      _
    $region31: #{tpu_custom_call.1} parent=1 // pred_check_branch
      %96 = sbr.rel (0) target = $region33
    $region32: #{tpu_custom_call.1} parent=1 // pred_region
      _
    $region33: #{tpu_custom_call.1} parent=1 // pred_fallthru
      _
    // Predicated region
    $region34: #{tpu_custom_call.1} parent=1 // pred_check
      _
    $region35: #{tpu_custom_call.1} parent=1 // pred_check_branch
      %98 = sbr.rel (0) target = $region37
    $region36: #{tpu_custom_call.1} parent=1 // pred_region
      %100 = vsyncadd [#allocation12], 0
      %s102 = sshll.u32 %s8, 4
      %s103 = int_to_ptr.hbm [resolvable:$true] %s102
      %s104 = sshll.u32 [#allocation11], 4
      %s105 = int_to_ptr.vmem [resolvable:$true] %s104
      %107 = dma.hbm_to_vmem [thread:$0]  %s103, 16, %s105, [#allocation12]
    $region37: #{tpu_custom_call.1} parent=1 // pred_fallthru
      _
    // Predicated region
    $region38: #{tpu_custom_call.1} parent=1 // pred_check
      _
    $region39: #{tpu_custom_call.1} parent=1 // pred_check_branch
      %109 = sbr.rel (0) target = $region41
    $region40: #{tpu_custom_call.1} parent=1 // pred_region
      %111 = vsyncadd [#allocation12], 0
      %s112 = sshll.u32 %s9, 4
      %s113 = int_to_ptr.hbm [resolvable:$true] %s112
      %s114 = sshll.u32 [#allocation13], 4
      %s115 = int_to_ptr.vmem [resolvable:$true] %s114
      %120 = dma.hbm_to_vmem [thread:$0]  %s113, 2048, %s115, [#allocation12], 128, 128, 8
    $region41: #{tpu_custom_call.1} parent=1 // pred_fallthru
      _
    // Predicated region
    $region42: #{tpu_custom_call.1} parent=1 // pred_check
      _
    $region43: #{tpu_custom_call.1} parent=1 // pred_check_branch
      %122 = sbr.rel (0) target = $region45
    $region44: #{tpu_custom_call.1} parent=1 // pred_region
      %124 = vsyncadd [#allocation15], 0
      %s126 = sshll.u32 %s10, 4
      %s127 = int_to_ptr.hbm [resolvable:$true] %s126
      %s128 = sshll.u32 [#allocation14], 4
      %s129 = int_to_ptr.vmem [resolvable:$true] %s128
      %131 = dma.hbm_to_vmem [thread:$0]  %s127, 16, %s129, [#allocation15]
    $region45: #{tpu_custom_call.1} parent=1 // pred_fallthru
      _
    // Predicated region
    $region46: #{tpu_custom_call.1} parent=1 // pred_check
      _
    $region47: #{tpu_custom_call.1} parent=1 // pred_check_branch
      %133 = sbr.rel (0) target = $region49
    $region48: #{tpu_custom_call.1} parent=1 // pred_region
      %135 = vsyncadd [#allocation15], 0
      %s137 = sshll.u32 %s11, 4
      %s138 = int_to_ptr.hbm [resolvable:$true] %s137
      %s139 = sshll.u32 [#allocation16], 4
      %s140 = int_to_ptr.vmem [resolvable:$true] %s139
      %142 = dma.hbm_to_vmem [thread:$0]  %s138, 16, %s140, [#allocation15]
    $region49: #{tpu_custom_call.1} parent=1 // pred_fallthru
      _
    // Predicated region
    $region50: #{tpu_custom_call.1} parent=1 // pred_check
      _
    $region51: #{tpu_custom_call.1} parent=1 // pred_check_branch
      %144 = sbr.rel (0) target = $region53
    $region52: #{tpu_custom_call.1} parent=1 // pred_region
      %146 = vsyncadd [#allocation18], 0
      %s148 = sshll.u32 %s12, 4
      %s149 = int_to_ptr.hbm [resolvable:$true] %s148
      %s150 = sshll.u32 [#allocation17], 4
      %s151 = int_to_ptr.vmem [resolvable:$true] %s150
      %153 = dma.hbm_to_vmem [thread:$0]  %s149, 16, %s151, [#allocation18]
    $region53: #{tpu_custom_call.1} parent=1 // pred_fallthru
      _
    // Predicated region
    $region54: #{tpu_custom_call.1} parent=1 // pred_check
      _
    $region55: #{tpu_custom_call.1} parent=1 // pred_check_branch
      %155 = sbr.rel (0) target = $region57
    $region56: #{tpu_custom_call.1} parent=1 // pred_region
      %157 = vsyncadd [#allocation18], 0
      %s158 = sshll.u32 %s13, 4
      %s159 = int_to_ptr.hbm [resolvable:$true] %s158
      %s160 = sshll.u32 [#allocation19], 4
      %s161 = int_to_ptr.vmem [resolvable:$true] %s160
      %166 = dma.hbm_to_vmem [thread:$0]  %s159, 4096, %s161, [#allocation18], 256, 256, 16
    $region57: #{tpu_custom_call.1} parent=1 // pred_fallthru
      _
    // Predicated region
    $region58: #{tpu_custom_call.1} parent=1 // pred_check
      _
    $region59: #{tpu_custom_call.1} parent=1 // pred_check_branch
      %168 = sbr.rel (0) target = $region61
    $region60: #{tpu_custom_call.1} parent=1 // pred_region
      _
    $region61: #{tpu_custom_call.1} parent=1 // pred_fallthru
      _
    // Predicated region
    $region62: #{tpu_custom_call.1} parent=1 // pred_check
      _
    $region63: #{tpu_custom_call.1} parent=1 // pred_check_branch
      %170 = sbr.rel (0) target = $region65
    $region64: #{tpu_custom_call.1} parent=1 // pred_region
      _
    $region65: #{tpu_custom_call.1} parent=1 // pred_fallthru
      _
    // Predicated region
    $region66: #{tpu_custom_call.1} parent=1 // pred_check
      _
    $region67: #{tpu_custom_call.1} parent=1 // pred_check_branch
      %172 = sbr.rel (0) target = $region69
    $region68: #{tpu_custom_call.1} parent=1 // pred_region
      %174 = dma.done [#allocation3], 512
    $region69: #{tpu_custom_call.1} parent=1 // pred_fallthru
      _
    // Predicated region
    $region70: #{tpu_custom_call.1} parent=1 // pred_check
      _
    $region71: #{tpu_custom_call.1} parent=1 // pred_check_branch
      %176 = sbr.rel (0) target = $region73
    $region72: #{tpu_custom_call.1} parent=1 // pred_region
      %178 = dma.done [#allocation6], 16384
    $region73: #{tpu_custom_call.1} parent=1 // pred_fallthru
      _
    // Predicated region
    $region74: #{tpu_custom_call.1} parent=1 // pred_check
      _
    $region75: #{tpu_custom_call.1} parent=1 // pred_check_branch
      %180 = sbr.rel (0) target = $region77
    $region76: #{tpu_custom_call.1} parent=1 // pred_region
      %182 = dma.done [#allocation6], 32
    $region77: #{tpu_custom_call.1} parent=1 // pred_fallthru
      _
    // Predicated region
    $region78: #{tpu_custom_call.1} parent=1 // pred_check
      _
    $region79: #{tpu_custom_call.1} parent=1 // pred_check_branch
      %184 = sbr.rel (0) target = $region81
    $region80: #{tpu_custom_call.1} parent=1 // pred_region
      %186 = dma.done [#allocation9], 32
    $region81: #{tpu_custom_call.1} parent=1 // pred_fallthru
      _
    // Predicated region
    $region82: #{tpu_custom_call.1} parent=1 // pred_check
      _
    $region83: #{tpu_custom_call.1} parent=1 // pred_check_branch
      %188 = sbr.rel (0) target = $region85
    $region84: #{tpu_custom_call.1} parent=1 // pred_region
      %190 = dma.done [#allocation9], 4096
    $region85: #{tpu_custom_call.1} parent=1 // pred_fallthru
      _
    // Predicated region
    $region86: #{tpu_custom_call.1} parent=1 // pred_check
      _
    $region87: #{tpu_custom_call.1} parent=1 // pred_check_branch
      %192 = sbr.rel (0) target = $region89
    $region88: #{tpu_custom_call.1} parent=1 // pred_region
      %194 = dma.done [#allocation12], 16
    $region89: #{tpu_custom_call.1} parent=1 // pred_fallthru
      _
    // Predicated region
    $region90: #{tpu_custom_call.1} parent=1 // pred_check
      _
    $region91: #{tpu_custom_call.1} parent=1 // pred_check_branch
      %196 = sbr.rel (0) target = $region93
    $region92: #{tpu_custom_call.1} parent=1 // pred_region
      %198 = dma.done [#allocation12], 2048
    $region93: #{tpu_custom_call.1} parent=1 // pred_fallthru
      _
    // Predicated region
    $region94: #{tpu_custom_call.1} parent=1 // pred_check
      _
    $region95: #{tpu_custom_call.1} parent=1 // pred_check_branch
      %200 = sbr.rel (0) target = $region97
    $region96: #{tpu_custom_call.1} parent=1 // pred_region
      %202 = dma.done [#allocation15], 16
    $region97: #{tpu_custom_call.1} parent=1 // pred_fallthru
      _
    // Predicated region
    $region98: #{tpu_custom_call.1} parent=1 // pred_check
      _
    $region99: #{tpu_custom_call.1} parent=1 // pred_check_branch
      %204 = sbr.rel (0) target = $region101
    $region100: #{tpu_custom_call.1} parent=1 // pred_region
      %206 = dma.done [#allocation15], 16
    $region101: #{tpu_custom_call.1} parent=1 // pred_fallthru
      _
    // Predicated region
    $region102: #{tpu_custom_call.1} parent=1 // pred_check
      _
    $region103: #{tpu_custom_call.1} parent=1 // pred_check_branch
      %208 = sbr.rel (0) target = $region105
    $region104: #{tpu_custom_call.1} parent=1 // pred_region
      %210 = dma.done [#allocation18], 16
    $region105: #{tpu_custom_call.1} parent=1 // pred_fallthru
      _
    // Predicated region
    $region106: #{tpu_custom_call.1} parent=1 // pred_check
      _
    $region107: #{tpu_custom_call.1} parent=1 // pred_check_branch
      %212 = sbr.rel (0) target = $region109
    $region108: #{tpu_custom_call.1} parent=1 // pred_region
      %214 = dma.done [#allocation18], 4096
    $region109: #{tpu_custom_call.1} parent=1 // pred_fallthru
      _
    %v215 = vld [vmem:[#allocation2] sm:$0xff]
    %v216 = vld [vmem:[#allocation2 + $0x8] sm:$0xff]
    %v217 = vld [vmem:[#allocation2 + $0x10] sm:$0xff]
    %v218 = vld [vmem:[#allocation2 + $0x18] sm:$0xff]
    %v219 = vld [vmem:[#allocation5] sm:$0xff]
    %v220 = vld [vmem:[#allocation5 + $0x8] sm:$0xff]
    %v221 = vld [vmem:[#allocation5 + $0x10] sm:$0xff]
    %v222 = vld [vmem:[#allocation5 + $0x18] sm:$0xff]
    %v223 = vld [vmem:[#allocation5 + $0x20] sm:$0xff]
    %v224 = vld [vmem:[#allocation5 + $0x28] sm:$0xff]
    %v225 = vld [vmem:[#allocation5 + $0x30] sm:$0xff]
    %v226 = vld [vmem:[#allocation5 + $0x38] sm:$0xff]
    %v227 = vld [vmem:[#allocation5 + $0x40] sm:$0xff]
    %v228 = vld [vmem:[#allocation5 + $0x48] sm:$0xff]
    %v229 = vld [vmem:[#allocation5 + $0x50] sm:$0xff]
    %v230 = vld [vmem:[#allocation5 + $0x58] sm:$0xff]
    %v231 = vld [vmem:[#allocation5 + $0x60] sm:$0xff]
    %v232 = vld [vmem:[#allocation5 + $0x68] sm:$0xff]
    %v233 = vld [vmem:[#allocation5 + $0x70] sm:$0xff]
    %v234 = vld [vmem:[#allocation5 + $0x78] sm:$0xff]
    %v235 = vld [vmem:[#allocation5 + $0x80] sm:$0xff]
    %v236 = vld [vmem:[#allocation5 + $0x88] sm:$0xff]
    %v237 = vld [vmem:[#allocation5 + $0x90] sm:$0xff]
    %v238 = vld [vmem:[#allocation5 + $0x98] sm:$0xff]
    %v239 = vld [vmem:[#allocation5 + $0xa0] sm:$0xff]
    %v240 = vld [vmem:[#allocation5 + $0xa8] sm:$0xff]
    %v241 = vld [vmem:[#allocation5 + $0xb0] sm:$0xff]
    %v242 = vld [vmem:[#allocation5 + $0xb8] sm:$0xff]
    %v243 = vld [vmem:[#allocation5 + $0xc0] sm:$0xff]
    %v244 = vld [vmem:[#allocation5 + $0xc8] sm:$0xff]
    %v245 = vld [vmem:[#allocation5 + $0xd0] sm:$0xff]
    %v246 = vld [vmem:[#allocation5 + $0xd8] sm:$0xff]
    %v247 = vld [vmem:[#allocation5 + $0xe0] sm:$0xff]
    %v248 = vld [vmem:[#allocation5 + $0xe8] sm:$0xff]
    %v249 = vld [vmem:[#allocation5 + $0xf0] sm:$0xff]
    %v250 = vld [vmem:[#allocation5 + $0xf8] sm:$0xff]
    %v251 = vld [vmem:[#allocation5 + $0x100] sm:$0xff]
    %v252 = vld [vmem:[#allocation5 + $0x108] sm:$0xff]
    %v253 = vld [vmem:[#allocation5 + $0x110] sm:$0xff]
    %v254 = vld [vmem:[#allocation5 + $0x118] sm:$0xff]
    %v255 = vld [vmem:[#allocation5 + $0x120] sm:$0xff]
    %v256 = vld [vmem:[#allocation5 + $0x128] sm:$0xff]
    %v257 = vld [vmem:[#allocation5 + $0x130] sm:$0xff]
    %v258 = vld [vmem:[#allocation5 + $0x138] sm:$0xff]
    %v259 = vld [vmem:[#allocation5 + $0x140] sm:$0xff]
    %v260 = vld [vmem:[#allocation5 + $0x148] sm:$0xff]
    %v261 = vld [vmem:[#allocation5 + $0x150] sm:$0xff]
    %v262 = vld [vmem:[#allocation5 + $0x158] sm:$0xff]
    %v263 = vld [vmem:[#allocation5 + $0x160] sm:$0xff]
    %v264 = vld [vmem:[#allocation5 + $0x168] sm:$0xff]
    %v265 = vld [vmem:[#allocation5 + $0x170] sm:$0xff]
    %v266 = vld [vmem:[#allocation5 + $0x178] sm:$0xff]
    %v267 = vld [vmem:[#allocation5 + $0x180] sm:$0xff]
    %v268 = vld [vmem:[#allocation5 + $0x188] sm:$0xff]
    %v269 = vld [vmem:[#allocation5 + $0x190] sm:$0xff]
    %v270 = vld [vmem:[#allocation5 + $0x198] sm:$0xff]
    %v271 = vld [vmem:[#allocation5 + $0x1a0] sm:$0xff]
    %v272 = vld [vmem:[#allocation5 + $0x1a8] sm:$0xff]
    %v273 = vld [vmem:[#allocation5 + $0x1b0] sm:$0xff]
    %v274 = vld [vmem:[#allocation5 + $0x1b8] sm:$0xff]
    %v275 = vld [vmem:[#allocation5 + $0x1c0] sm:$0xff]
    %v276 = vld [vmem:[#allocation5 + $0x1c8] sm:$0xff]
    %v277 = vld [vmem:[#allocation5 + $0x1d0] sm:$0xff]
    %v278 = vld [vmem:[#allocation5 + $0x1d8] sm:$0xff]
    %v279 = vld [vmem:[#allocation5 + $0x1e0] sm:$0xff]
    %v280 = vld [vmem:[#allocation5 + $0x1e8] sm:$0xff]
    %v281 = vld [vmem:[#allocation5 + $0x1f0] sm:$0xff]
    %v282 = vld [vmem:[#allocation5 + $0x1f8] sm:$0xff]
    %v283 = vld [vmem:[#allocation5 + $0x200] sm:$0xff]
    %v284 = vld [vmem:[#allocation5 + $0x208] sm:$0xff]
    %v285 = vld [vmem:[#allocation5 + $0x210] sm:$0xff]
    %v286 = vld [vmem:[#allocation5 + $0x218] sm:$0xff]
    %v287 = vld [vmem:[#allocation5 + $0x220] sm:$0xff]
    %v288 = vld [vmem:[#allocation5 + $0x228] sm:$0xff]
    %v289 = vld [vmem:[#allocation5 + $0x230] sm:$0xff]
    %v290 = vld [vmem:[#allocation5 + $0x238] sm:$0xff]
    %v291 = vld [vmem:[#allocation5 + $0x240] sm:$0xff]
    %v292 = vld [vmem:[#allocation5 + $0x248] sm:$0xff]
    %v293 = vld [vmem:[#allocation5 + $0x250] sm:$0xff]
    %v294 = vld [vmem:[#allocation5 + $0x258] sm:$0xff]
    %v295 = vld [vmem:[#allocation5 + $0x260] sm:$0xff]
    %v296 = vld [vmem:[#allocation5 + $0x268] sm:$0xff]
    %v297 = vld [vmem:[#allocation5 + $0x270] sm:$0xff]
    %v298 = vld [vmem:[#allocation5 + $0x278] sm:$0xff]
    %v299 = vld [vmem:[#allocation5 + $0x280] sm:$0xff]
    %v300 = vld [vmem:[#allocation5 + $0x288] sm:$0xff]
    %v301 = vld [vmem:[#allocation5 + $0x290] sm:$0xff]
    %v302 = vld [vmem:[#allocation5 + $0x298] sm:$0xff]
    %v303 = vld [vmem:[#allocation5 + $0x2a0] sm:$0xff]
    %v304 = vld [vmem:[#allocation5 + $0x2a8] sm:$0xff]
    %v305 = vld [vmem:[#allocation5 + $0x2b0] sm:$0xff]
    %v306 = vld [vmem:[#allocation5 + $0x2b8] sm:$0xff]
    %v307 = vld [vmem:[#allocation5 + $0x2c0] sm:$0xff]
    %v308 = vld [vmem:[#allocation5 + $0x2c8] sm:$0xff]
    %v309 = vld [vmem:[#allocation5 + $0x2d0] sm:$0xff]
    %v310 = vld [vmem:[#allocation5 + $0x2d8] sm:$0xff]
    %v311 = vld [vmem:[#allocation5 + $0x2e0] sm:$0xff]
    %v312 = vld [vmem:[#allocation5 + $0x2e8] sm:$0xff]
    %v313 = vld [vmem:[#allocation5 + $0x2f0] sm:$0xff]
    %v314 = vld [vmem:[#allocation5 + $0x2f8] sm:$0xff]
    %v315 = vld [vmem:[#allocation5 + $0x300] sm:$0xff]
    %v316 = vld [vmem:[#allocation5 + $0x308] sm:$0xff]
    %v317 = vld [vmem:[#allocation5 + $0x310] sm:$0xff]
    %v318 = vld [vmem:[#allocation5 + $0x318] sm:$0xff]
    %v319 = vld [vmem:[#allocation5 + $0x320] sm:$0xff]
    %v320 = vld [vmem:[#allocation5 + $0x328] sm:$0xff]
    %v321 = vld [vmem:[#allocation5 + $0x330] sm:$0xff]
    %v322 = vld [vmem:[#allocation5 + $0x338] sm:$0xff]
    %v323 = vld [vmem:[#allocation5 + $0x340] sm:$0xff]
    %v324 = vld [vmem:[#allocation5 + $0x348] sm:$0xff]
    %v325 = vld [vmem:[#allocation5 + $0x350] sm:$0xff]
    %v326 = vld [vmem:[#allocation5 + $0x358] sm:$0xff]
    %v327 = vld [vmem:[#allocation5 + $0x360] sm:$0xff]
    %v328 = vld [vmem:[#allocation5 + $0x368] sm:$0xff]
    %v329 = vld [vmem:[#allocation5 + $0x370] sm:$0xff]
    %v330 = vld [vmem:[#allocation5 + $0x378] sm:$0xff]
    %v331 = vld [vmem:[#allocation5 + $0x380] sm:$0xff]
    %v332 = vld [vmem:[#allocation5 + $0x388] sm:$0xff]
    %v333 = vld [vmem:[#allocation5 + $0x390] sm:$0xff]
    %v334 = vld [vmem:[#allocation5 + $0x398] sm:$0xff]
    %v335 = vld [vmem:[#allocation5 + $0x3a0] sm:$0xff]
    %v336 = vld [vmem:[#allocation5 + $0x3a8] sm:$0xff]
    %v337 = vld [vmem:[#allocation5 + $0x3b0] sm:$0xff]
    %v338 = vld [vmem:[#allocation5 + $0x3b8] sm:$0xff]
    %v339 = vld [vmem:[#allocation5 + $0x3c0] sm:$0xff]
    %v340 = vld [vmem:[#allocation5 + $0x3c8] sm:$0xff]
    %v341 = vld [vmem:[#allocation5 + $0x3d0] sm:$0xff]
    %v342 = vld [vmem:[#allocation5 + $0x3d8] sm:$0xff]
    %v343 = vld [vmem:[#allocation5 + $0x3e0] sm:$0xff]
    %v344 = vld [vmem:[#allocation5 + $0x3e8] sm:$0xff]
    %v345 = vld [vmem:[#allocation5 + $0x3f0] sm:$0xff]
    %v346 = vld [vmem:[#allocation5 + $0x3f8] sm:$0xff]
    %v347 = vld [vmem:[#allocation7] sm:$0x3]
    %v349 = vperm.slane %v347, 0
    %v350 = vperm.slane %v347, 1
    %353 = vmatpush.msra.mxu0 %v249
    %354 = vmatpush.msra.mxu0 %v247
    %355 = vmatpush.msra.mxu0 %v245
    %356 = vmatpush.msra.mxu0 %v243
    %357 = vmatpush.msra.mxu0 %v241
    %358 = vmatpush.msra.mxu0 %v239
    %359 = vmatpush.msra.mxu0 %v237
    %360 = vmatpush.msra.mxu0 %v235
    %361 = vmatpush.msra.mxu0 %v233
    %362 = vmatpush.msra.mxu0 %v231
    %363 = vmatpush.msra.mxu0 %v229
    %364 = vmatpush.msra.mxu0 %v227
    %365 = vmatpush.msra.mxu0 %v225
    %366 = vmatpush.msra.mxu0 %v223
    %367 = vmatpush.msra.mxu0 %v221
    %368 = vmatpush.msra.mxu0 %v219
    %369 = vmatmul.f32.gmra.mxu0 %v215
    %v370 = vpop.f32.mrf.mxu0
    %v371 = vadd.f32 %v349, %v370
    %372 = vdwg.mxu0
    %373 = vmatpush.msra.mxu0 %v281
    %374 = vmatpush.msra.mxu0 %v279
    %375 = vmatpush.msra.mxu0 %v277
    %376 = vmatpush.msra.mxu0 %v275
    %377 = vmatpush.msra.mxu0 %v273
    %378 = vmatpush.msra.mxu0 %v271
    %379 = vmatpush.msra.mxu0 %v269
    %380 = vmatpush.msra.mxu0 %v267
    %381 = vmatpush.msra.mxu0 %v265
    %382 = vmatpush.msra.mxu0 %v263
    %383 = vmatpush.msra.mxu0 %v261
    %384 = vmatpush.msra.mxu0 %v259
    %385 = vmatpush.msra.mxu0 %v257
    %386 = vmatpush.msra.mxu0 %v255
    %387 = vmatpush.msra.mxu0 %v253
    %388 = vmatpush.msra.mxu0 %v251
    %389 = vmatmul.f32.gmra.mxu0 %v216
    %v390 = vpop.f32.mrf.mxu0
    %v391 = vadd.f32 %v371, %v390
    %392 = vdwg.mxu0
    %393 = vmatpush.msra.mxu0 %v313
    %394 = vmatpush.msra.mxu0 %v311
    %395 = vmatpush.msra.mxu0 %v309
    %396 = vmatpush.msra.mxu0 %v307
    %397 = vmatpush.msra.mxu0 %v305
    %398 = vmatpush.msra.mxu0 %v303
    %399 = vmatpush.msra.mxu0 %v301
    %400 = vmatpush.msra.mxu0 %v299
    %401 = vmatpush.msra.mxu0 %v297
    %402 = vmatpush.msra.mxu0 %v295
    %403 = vmatpush.msra.mxu0 %v293
    %404 = vmatpush.msra.mxu0 %v291
    %405 = vmatpush.msra.mxu0 %v289
    %406 = vmatpush.msra.mxu0 %v287
    %407 = vmatpush.msra.mxu0 %v285
    %408 = vmatpush.msra.mxu0 %v283
    %409 = vmatmul.f32.gmra.mxu0 %v217
    %v410 = vpop.f32.mrf.mxu0
    %v411 = vadd.f32 %v391, %v410
    %412 = vdwg.mxu0
    %413 = vmatpush.msra.mxu0 %v345
    %414 = vmatpush.msra.mxu0 %v343
    %415 = vmatpush.msra.mxu0 %v341
    %416 = vmatpush.msra.mxu0 %v339
    %417 = vmatpush.msra.mxu0 %v337
    %418 = vmatpush.msra.mxu0 %v335
    %419 = vmatpush.msra.mxu0 %v333
    %420 = vmatpush.msra.mxu0 %v331
    %421 = vmatpush.msra.mxu0 %v329
    %422 = vmatpush.msra.mxu0 %v327
    %423 = vmatpush.msra.mxu0 %v325
    %424 = vmatpush.msra.mxu0 %v323
    %425 = vmatpush.msra.mxu0 %v321
    %426 = vmatpush.msra.mxu0 %v319
    %427 = vmatpush.msra.mxu0 %v317
    %428 = vmatpush.msra.mxu0 %v315
    %429 = vmatmul.f32.gmra.mxu0 %v218
    %v430 = vpop.f32.mrf.mxu0
    %v431 = vadd.f32 %v411, %v430
    %432 = vdwg.mxu0
    %433 = vmatpush.msra.mxu0 %v250
    %434 = vmatpush.msra.mxu0 %v248
    %435 = vmatpush.msra.mxu0 %v246
    %436 = vmatpush.msra.mxu0 %v244
    %437 = vmatpush.msra.mxu0 %v242
    %438 = vmatpush.msra.mxu0 %v240
    %439 = vmatpush.msra.mxu0 %v238
    %440 = vmatpush.msra.mxu0 %v236
    %441 = vmatpush.msra.mxu0 %v234
    %442 = vmatpush.msra.mxu0 %v232
    %443 = vmatpush.msra.mxu0 %v230
    %444 = vmatpush.msra.mxu0 %v228
    %445 = vmatpush.msra.mxu0 %v226
    %446 = vmatpush.msra.mxu0 %v224
    %447 = vmatpush.msra.mxu0 %v222
    %448 = vmatpush.msra.mxu0 %v220
    %449 = vmatmul.f32.gmra.mxu0 %v215
    %v450 = vpop.f32.mrf.mxu0
    %v451 = vadd.f32 %v350, %v450
    %452 = vdwg.mxu0
    %453 = vmatpush.msra.mxu0 %v282
    %454 = vmatpush.msra.mxu0 %v280
    %455 = vmatpush.msra.mxu0 %v278
    %456 = vmatpush.msra.mxu0 %v276
    %457 = vmatpush.msra.mxu0 %v274
    %458 = vmatpush.msra.mxu0 %v272
    %459 = vmatpush.msra.mxu0 %v270
    %460 = vmatpush.msra.mxu0 %v268
    %461 = vmatpush.msra.mxu0 %v266
    %462 = vmatpush.msra.mxu0 %v264
    %463 = vmatpush.msra.mxu0 %v262
    %464 = vmatpush.msra.mxu0 %v260
    %465 = vmatpush.msra.mxu0 %v258
    %466 = vmatpush.msra.mxu0 %v256
    %467 = vmatpush.msra.mxu0 %v254
    %468 = vmatpush.msra.mxu0 %v252
    %469 = vmatmul.f32.gmra.mxu0 %v216
    %v470 = vpop.f32.mrf.mxu0
    %v471 = vadd.f32 %v451, %v470
    %472 = vdwg.mxu0
    %473 = vmatpush.msra.mxu0 %v314
    %474 = vmatpush.msra.mxu0 %v312
    %475 = vmatpush.msra.mxu0 %v310
    %476 = vmatpush.msra.mxu0 %v308
    %477 = vmatpush.msra.mxu0 %v306
    %478 = vmatpush.msra.mxu0 %v304
    %479 = vmatpush.msra.mxu0 %v302
    %480 = vmatpush.msra.mxu0 %v300
    %481 = vmatpush.msra.mxu0 %v298
    %482 = vmatpush.msra.mxu0 %v296
    %483 = vmatpush.msra.mxu0 %v294
    %484 = vmatpush.msra.mxu0 %v292
    %485 = vmatpush.msra.mxu0 %v290
    %486 = vmatpush.msra.mxu0 %v288
    %487 = vmatpush.msra.mxu0 %v286
    %488 = vmatpush.msra.mxu0 %v284
    %489 = vmatmul.f32.gmra.mxu0 %v217
    %v490 = vpop.f32.mrf.mxu0
    %v491 = vadd.f32 %v471, %v490
    %492 = vdwg.mxu0
    %493 = vmatpush.msra.mxu0 %v346
    %494 = vmatpush.msra.mxu0 %v344
    %495 = vmatpush.msra.mxu0 %v342
    %496 = vmatpush.msra.mxu0 %v340
    %497 = vmatpush.msra.mxu0 %v338
    %498 = vmatpush.msra.mxu0 %v336
    %499 = vmatpush.msra.mxu0 %v334
    %500 = vmatpush.msra.mxu0 %v332
    %501 = vmatpush.msra.mxu0 %v330
    %502 = vmatpush.msra.mxu0 %v328
    %503 = vmatpush.msra.mxu0 %v326
    %504 = vmatpush.msra.mxu0 %v324
    %505 = vmatpush.msra.mxu0 %v322
    %506 = vmatpush.msra.mxu0 %v320
    %507 = vmatpush.msra.mxu0 %v318
    %508 = vmatpush.msra.mxu0 %v316
    %509 = vmatmul.f32.gmra.mxu0 %v218
    %v510 = vpop.f32.mrf.mxu0
    %v511 = vadd.f32 %v491, %v510
    %512 = vdwg.mxu0
    %v513 = vmax.f32 %v431, -3.4028235e+38
    %v514 = vmax.f32 %v511, -3.4028235e+38
    %v515 = vmin.f32 %v513, 3.4028235e+38
    %v516 = vmin.f32 %v514, 3.4028235e+38
    %vm517 = vcmp.ne.f32.partialorder %v515, %v515
    %vm518 = vcmp.ne.f32.partialorder %v516, %v516
    %v519 = vsel %vm517, 1e-07, %v515
    %v520 = vsel %vm518, 1e-07, %v516
    %vm521 = vcmp.ge.f32.partialorder %v519, 0.0
    %vm522 = vcmp.ge.f32.partialorder %v520, 0.0
    %v523 = vmul.f32 %v519, 0.01
    %v524 = vmul.f32 %v520, 0.01
    %v525 = vsel %vm521, %v519, %v523
    %v526 = vsel %vm522, %v520, %v524
    %v527 = vrot.slane %v525, 4
    %v528 = vadd.f32 %v525, %v527
    %v529 = vrot.slane %v528, 2
    %v530 = vadd.f32 %v528, %v529
    %v531 = vrot.slane %v530, 1
    %v532 = vadd.f32 %v530, %v531
    %v533 = vrot.slane %v526, 4
    %v534 = vadd.f32 %v526, %v533
    %v535 = vrot.slane %v534, 2
    %v536 = vadd.f32 %v534, %v535
    %v537 = vrot.slane %v536, 1
    %v538 = vadd.f32 %v536, %v537
    %v539 = vmul.f32 %v532, 0.125
    %v540 = vmul.f32 %v538, 0.125
    %v541 = vmul.f32 %v525, %v525
    %v542 = vmul.f32 %v526, %v526
    %v543 = vrot.slane %v541, 4
    %v544 = vadd.f32 %v541, %v543
    %v545 = vrot.slane %v544, 2
    %v546 = vadd.f32 %v544, %v545
    %v547 = vrot.slane %v546, 1
    %v548 = vadd.f32 %v546, %v547
    %v549 = vrot.slane %v542, 4
    %v550 = vadd.f32 %v542, %v549
    %v551 = vrot.slane %v550, 2
    %v552 = vadd.f32 %v550, %v551
    %v553 = vrot.slane %v552, 1
    %v554 = vadd.f32 %v552, %v553
    %v555 = vmul.f32 %v548, 0.125
    %v556 = vmul.f32 %v554, 0.125
    %v557 = vmul.f32 %v539, %v539
    %v558 = vmul.f32 %v540, %v540
    %v559 = vsub.f32 %v555, %v557
    %v560 = vsub.f32 %v556, %v558
    %v561 = vmax.f32 %v559, 0.0
    %v562 = vmax.f32 %v560, 0.0
    %v563 = vsub.f32 %v525, %v539
    %v564 = vsub.f32 %v526, %v540
    %v565 = vadd.f32 %v561, 1e-05
    %v566 = vadd.f32 %v562, 1e-05
    %v567 = vrsqrt.pop %v565
    %v568 = vmul.f32 %v567, %v565
    %v569 = vmul.f32 %v568, %v567
    %v570 = vmul.f32 0.5, %v569
    %v571 = vsub.f32 1.5, %v570
    %v572 = vmul.f32 %v567, %v571
    %vm573 = vweird.f32 %v565
    %vm574 = vweird.f32 %v567
    %vm575 = vmor %vm573, %vm574
    %v576 = vsel %vm575, %v567, %v572
    %v577 = vrsqrt.pop %v566
    %v578 = vmul.f32 %v577, %v566
    %v579 = vmul.f32 %v578, %v577
    %v580 = vmul.f32 0.5, %v579
    %v581 = vsub.f32 1.5, %v580
    %v582 = vmul.f32 %v577, %v581
    %vm583 = vweird.f32 %v566
    %vm584 = vweird.f32 %v577
    %vm585 = vmor %vm583, %vm584
    %v586 = vsel %vm585, %v577, %v582
    %v587 = vmul.f32 %v563, %v576
    %v588 = vmul.f32 %v564, %v586
    %v589 = vld [vmem:[%s3] sm:$0x3]
    %v591 = vperm.slane %v589, 0
    %v592 = vperm.slane %v589, 1
    %v595 = vmul.f32 %v587, %v591
    %v596 = vmul.f32 %v588, %v592
    %v597 = vld [vmem:[#allocation8] sm:$0x3]
    %v599 = vperm.slane %v597, 0
    %v600 = vperm.slane %v597, 1
    %v603 = vadd.f32 %v595, %v599
    %v604 = vadd.f32 %v596, %v600
    %v605 = vld [vmem:[#allocation10] sm:$0xff]
    %v606 = vld [vmem:[#allocation10 + $0x8] sm:$0xff]
    %v607 = vld [vmem:[#allocation10 + $0x10] sm:$0xff]
    %v608 = vld [vmem:[#allocation10 + $0x18] sm:$0xff]
    %v609 = vld [vmem:[#allocation10 + $0x20] sm:$0xff]
    %v610 = vld [vmem:[#allocation10 + $0x28] sm:$0xff]
    %v611 = vld [vmem:[#allocation10 + $0x30] sm:$0xff]
    %v612 = vld [vmem:[#allocation10 + $0x38] sm:$0xff]
    %v613 = vld [vmem:[#allocation10 + $0x40] sm:$0xff]
    %v614 = vld [vmem:[#allocation10 + $0x48] sm:$0xff]
    %v615 = vld [vmem:[#allocation10 + $0x50] sm:$0xff]
    %v616 = vld [vmem:[#allocation10 + $0x58] sm:$0xff]
    %v617 = vld [vmem:[#allocation10 + $0x60] sm:$0xff]
    %v618 = vld [vmem:[#allocation10 + $0x68] sm:$0xff]
    %v619 = vld [vmem:[#allocation10 + $0x70] sm:$0xff]
    %v620 = vld [vmem:[#allocation10 + $0x78] sm:$0xff]
    %v621 = vld [vmem:[#allocation10 + $0x80] sm:$0xff]
    %v622 = vld [vmem:[#allocation10 + $0x88] sm:$0xff]
    %v623 = vld [vmem:[#allocation10 + $0x90] sm:$0xff]
    %v624 = vld [vmem:[#allocation10 + $0x98] sm:$0xff]
    %v625 = vld [vmem:[#allocation10 + $0xa0] sm:$0xff]
    %v626 = vld [vmem:[#allocation10 + $0xa8] sm:$0xff]
    %v627 = vld [vmem:[#allocation10 + $0xb0] sm:$0xff]
    %v628 = vld [vmem:[#allocation10 + $0xb8] sm:$0xff]
    %v629 = vld [vmem:[#allocation10 + $0xc0] sm:$0xff]
    %v630 = vld [vmem:[#allocation10 + $0xc8] sm:$0xff]
    %v631 = vld [vmem:[#allocation10 + $0xd0] sm:$0xff]
    %v632 = vld [vmem:[#allocation10 + $0xd8] sm:$0xff]
    %v633 = vld [vmem:[#allocation10 + $0xe0] sm:$0xff]
    %v634 = vld [vmem:[#allocation10 + $0xe8] sm:$0xff]
    %v635 = vld [vmem:[#allocation10 + $0xf0] sm:$0xff]
    %v636 = vld [vmem:[#allocation10 + $0xf8] sm:$0xff]
    %v637 = vld [vmem:[%s6] sm:$0x1]
    %v639 = vperm.slane %v637, 0
    %641 = vmatpush.msra.mxu0 %v620
    %642 = vmatpush.msra.mxu0 %v619
    %643 = vmatpush.msra.mxu0 %v618
    %644 = vmatpush.msra.mxu0 %v617
    %645 = vmatpush.msra.mxu0 %v616
    %646 = vmatpush.msra.mxu0 %v615
    %647 = vmatpush.msra.mxu0 %v614
    %648 = vmatpush.msra.mxu0 %v613
    %649 = vmatpush.msra.mxu0 %v612
    %650 = vmatpush.msra.mxu0 %v611
    %651 = vmatpush.msra.mxu0 %v610
    %652 = vmatpush.msra.mxu0 %v609
    %653 = vmatpush.msra.mxu0 %v608
    %654 = vmatpush.msra.mxu0 %v607
    %655 = vmatpush.msra.mxu0 %v606
    %656 = vmatpush.msra.mxu0 %v605
    %657 = vmatmul.f32.gmra.mxu0 %v603
    %v658 = vpop.f32.mrf.mxu0
    %v659 = vadd.f32 %v639, %v658
    %660 = vdwg.mxu0
    %661 = vmatpush.msra.mxu0 %v636
    %662 = vmatpush.msra.mxu0 %v635
    %663 = vmatpush.msra.mxu0 %v634
    %664 = vmatpush.msra.mxu0 %v633
    %665 = vmatpush.msra.mxu0 %v632
    %666 = vmatpush.msra.mxu0 %v631
    %667 = vmatpush.msra.mxu0 %v630
    %668 = vmatpush.msra.mxu0 %v629
    %669 = vmatpush.msra.mxu0 %v628
    %670 = vmatpush.msra.mxu0 %v627
    %671 = vmatpush.msra.mxu0 %v626
    %672 = vmatpush.msra.mxu0 %v625
    %673 = vmatpush.msra.mxu0 %v624
    %674 = vmatpush.msra.mxu0 %v623
    %675 = vmatpush.msra.mxu0 %v622
    %676 = vmatpush.msra.mxu0 %v621
    %677 = vmatmul.f32.gmra.mxu0 %v604
    %v678 = vpop.f32.mrf.mxu0
    %v679 = vadd.f32 %v659, %v678
    %680 = vdwg.mxu0
    %v681 = vmax.f32 %v679, -3.4028235e+38
    %v682 = vmin.f32 %v681, 3.4028235e+38
    %vm683 = vcmp.ne.f32.partialorder %v682, %v682
    %v684 = vsel %vm683, 1e-07, %v682
    %vm685 = vcmp.ge.f32.partialorder %v684, 0.0
    %v686 = vmul.f32 %v684, 0.01
    %v687 = vsel %vm685, %v684, %v686
    %v688 = vrot.slane %v687, 4
    %v689 = vadd.f32 %v687, %v688
    %v690 = vrot.slane %v689, 2
    %v691 = vadd.f32 %v689, %v690
    %v692 = vrot.slane %v691, 1
    %v693 = vadd.f32 %v691, %v692
    %v694 = vmul.f32 %v693, 0.125
    %v695 = vmul.f32 %v687, %v687
    %v696 = vrot.slane %v695, 4
    %v697 = vadd.f32 %v695, %v696
    %v698 = vrot.slane %v697, 2
    %v699 = vadd.f32 %v697, %v698
    %v700 = vrot.slane %v699, 1
    %v701 = vadd.f32 %v699, %v700
    %v702 = vmul.f32 %v701, 0.125
    %v703 = vmul.f32 %v694, %v694
    %v704 = vsub.f32 %v702, %v703
    %v705 = vmax.f32 %v704, 0.0
    %v706 = vsub.f32 %v687, %v694
    %v707 = vadd.f32 %v705, 1e-05
    %v708 = vrsqrt.pop %v707
    %v709 = vmul.f32 %v708, %v707
    %v710 = vmul.f32 %v709, %v708
    %v711 = vmul.f32 0.5, %v710
    %v712 = vsub.f32 1.5, %v711
    %v713 = vmul.f32 %v708, %v712
    %vm714 = vweird.f32 %v707
    %vm715 = vweird.f32 %v708
    %vm716 = vmor %vm714, %vm715
    %v717 = vsel %vm716, %v708, %v713
    %v718 = vmul.f32 %v706, %v717
    %v719 = vld [vmem:[%s7] sm:$0x1]
    %v721 = vperm.slane %v719, 0
    %v723 = vmul.f32 %v718, %v721
    %v724 = vld [vmem:[#allocation11] sm:$0x1]
    %v726 = vperm.slane %v724, 0
    %v728 = vadd.f32 %v723, %v726
    %v729 = vld [vmem:[#allocation13] sm:$0xff]
    %v730 = vld [vmem:[#allocation13 + $0x8] sm:$0xff]
    %v731 = vld [vmem:[#allocation13 + $0x10] sm:$0xff]
    %v732 = vld [vmem:[#allocation13 + $0x18] sm:$0xff]
    %v733 = vld [vmem:[#allocation13 + $0x20] sm:$0xff]
    %v734 = vld [vmem:[#allocation13 + $0x28] sm:$0xff]
    %v735 = vld [vmem:[#allocation13 + $0x30] sm:$0xff]
    %v736 = vld [vmem:[#allocation13 + $0x38] sm:$0xff]
    %v737 = vld [vmem:[#allocation13 + $0x40] sm:$0xff]
    %v738 = vld [vmem:[#allocation13 + $0x48] sm:$0xff]
    %v739 = vld [vmem:[#allocation13 + $0x50] sm:$0xff]
    %v740 = vld [vmem:[#allocation13 + $0x58] sm:$0xff]
    %v741 = vld [vmem:[#allocation13 + $0x60] sm:$0xff]
    %v742 = vld [vmem:[#allocation13 + $0x68] sm:$0xff]
    %v743 = vld [vmem:[#allocation13 + $0x70] sm:$0xff]
    %v744 = vld [vmem:[#allocation13 + $0x78] sm:$0xff]
    %v745 = vld [vmem:[#allocation14] sm:$0x1]
    %v747 = vperm.slane %v745, 0
    %749 = vmatpush.msra.mxu0 %v744
    %750 = vmatpush.msra.mxu0 %v743
    %751 = vmatpush.msra.mxu0 %v742
    %752 = vmatpush.msra.mxu0 %v741
    %753 = vmatpush.msra.mxu0 %v740
    %754 = vmatpush.msra.mxu0 %v739
    %755 = vmatpush.msra.mxu0 %v738
    %756 = vmatpush.msra.mxu0 %v737
    %757 = vmatpush.msra.mxu0 %v736
    %758 = vmatpush.msra.mxu0 %v735
    %759 = vmatpush.msra.mxu0 %v734
    %760 = vmatpush.msra.mxu0 %v733
    %761 = vmatpush.msra.mxu0 %v732
    %762 = vmatpush.msra.mxu0 %v731
    %763 = vmatpush.msra.mxu0 %v730
    %764 = vmatpush.msra.mxu0 %v729
    %765 = vmatmul.f32.gmra.mxu0 %v728
    %v766 = vpop.f32.mrf.mxu0
    %v767 = vadd.f32 %v747, %v766
    %768 = vdwg.mxu0
    %v769 = vmax.f32 %v767, -3.4028235e+38
    %v770 = vmin.f32 %v769, 3.4028235e+38
    %vm771 = vcmp.ne.f32.partialorder %v770, %v770
    %v772 = vsel %vm771, 1e-07, %v770
    %vm773 = vcmp.ge.f32.partialorder %v772, 0.0
    %v774 = vmul.f32 %v772, 0.01
    %v775 = vsel %vm773, %v772, %v774
    %v776 = vrot.slane %v775, 4
    %v777 = vadd.f32 %v775, %v776
    %v778 = vrot.slane %v777, 2
    %v779 = vadd.f32 %v777, %v778
    %v780 = vrot.slane %v779, 1
    %v781 = vadd.f32 %v779, %v780
    %v782 = vmul.f32 %v781, 0.125
    %v783 = vmul.f32 %v775, %v775
    %v784 = vrot.slane %v783, 4
    %v785 = vadd.f32 %v783, %v784
    %v786 = vrot.slane %v785, 2
    %v787 = vadd.f32 %v785, %v786
    %v788 = vrot.slane %v787, 1
    %v789 = vadd.f32 %v787, %v788
    %v790 = vmul.f32 %v789, 0.125
    %v791 = vmul.f32 %v782, %v782
    %v792 = vsub.f32 %v790, %v791
    %v793 = vmax.f32 %v792, 0.0
    %v794 = vsub.f32 %v775, %v782
    %v795 = vadd.f32 %v793, 1e-05
    %v796 = vrsqrt.pop %v795
    %v797 = vmul.f32 %v796, %v795
    %v798 = vmul.f32 %v797, %v796
    %v799 = vmul.f32 0.5, %v798
    %v800 = vsub.f32 1.5, %v799
    %v801 = vmul.f32 %v796, %v800
    %vm802 = vweird.f32 %v795
    %vm803 = vweird.f32 %v796
    %vm804 = vmor %vm802, %vm803
    %v805 = vsel %vm804, %v796, %v801
    %v806 = vmul.f32 %v794, %v805
    %v807 = vld [vmem:[#allocation16] sm:$0x1]
    %v809 = vperm.slane %v807, 0
    %v811 = vmul.f32 %v806, %v809
    %v812 = vld [vmem:[#allocation17] sm:$0x1]
    %v814 = vperm.slane %v812, 0
    %v816 = vadd.f32 %v811, %v814
    %v817 = vld [vmem:[#allocation19] sm:$0xff]
    %v818 = vld [vmem:[#allocation19 + $0x8] sm:$0xff]
    %v819 = vld [vmem:[#allocation19 + $0x10] sm:$0xff]
    %v820 = vld [vmem:[#allocation19 + $0x18] sm:$0xff]
    %v821 = vld [vmem:[#allocation19 + $0x20] sm:$0xff]
    %v822 = vld [vmem:[#allocation19 + $0x28] sm:$0xff]
    %v823 = vld [vmem:[#allocation19 + $0x30] sm:$0xff]
    %v824 = vld [vmem:[#allocation19 + $0x38] sm:$0xff]
    %v825 = vld [vmem:[#allocation19 + $0x40] sm:$0xff]
    %v826 = vld [vmem:[#allocation19 + $0x48] sm:$0xff]
    %v827 = vld [vmem:[#allocation19 + $0x50] sm:$0xff]
    %v828 = vld [vmem:[#allocation19 + $0x58] sm:$0xff]
    %v829 = vld [vmem:[#allocation19 + $0x60] sm:$0xff]
    %v830 = vld [vmem:[#allocation19 + $0x68] sm:$0xff]
    %v831 = vld [vmem:[#allocation19 + $0x70] sm:$0xff]
    %v832 = vld [vmem:[#allocation19 + $0x78] sm:$0xff]
    %v833 = vld [vmem:[#allocation19 + $0x80] sm:$0xff]
    %v834 = vld [vmem:[#allocation19 + $0x88] sm:$0xff]
    %v835 = vld [vmem:[#allocation19 + $0x90] sm:$0xff]
    %v836 = vld [vmem:[#allocation19 + $0x98] sm:$0xff]
    %v837 = vld [vmem:[#allocation19 + $0xa0] sm:$0xff]
    %v838 = vld [vmem:[#allocation19 + $0xa8] sm:$0xff]
    %v839 = vld [vmem:[#allocation19 + $0xb0] sm:$0xff]
    %v840 = vld [vmem:[#allocation19 + $0xb8] sm:$0xff]
    %v841 = vld [vmem:[#allocation19 + $0xc0] sm:$0xff]
    %v842 = vld [vmem:[#allocation19 + $0xc8] sm:$0xff]
    %v843 = vld [vmem:[#allocation19 + $0xd0] sm:$0xff]
    %v844 = vld [vmem:[#allocation19 + $0xd8] sm:$0xff]
    %v845 = vld [vmem:[#allocation19 + $0xe0] sm:$0xff]
    %v846 = vld [vmem:[#allocation19 + $0xe8] sm:$0xff]
    %v847 = vld [vmem:[#allocation19 + $0xf0] sm:$0xff]
    %v848 = vld [vmem:[#allocation19 + $0xf8] sm:$0xff]
    %v849 = vld [vmem:[%s14] sm:$0x3]
    %v851 = vperm.slane %v849, 0
    %v852 = vperm.slane %v849, 1
    %855 = vmatpush.msra.mxu0 %v847
    %856 = vmatpush.msra.mxu0 %v845
    %857 = vmatpush.msra.mxu0 %v843
    %858 = vmatpush.msra.mxu0 %v841
    %859 = vmatpush.msra.mxu0 %v839
    %860 = vmatpush.msra.mxu0 %v837
    %861 = vmatpush.msra.mxu0 %v835
    %862 = vmatpush.msra.mxu0 %v833
    %863 = vmatpush.msra.mxu0 %v831
    %864 = vmatpush.msra.mxu0 %v829
    %865 = vmatpush.msra.mxu0 %v827
    %866 = vmatpush.msra.mxu0 %v825
    %867 = vmatpush.msra.mxu0 %v823
    %868 = vmatpush.msra.mxu0 %v821
    %869 = vmatpush.msra.mxu0 %v819
    %870 = vmatpush.msra.mxu0 %v817
    %871 = vmatmul.f32.gmra.mxu0 %v816
    %v872 = vpop.f32.mrf.mxu0
    %v873 = vadd.f32 %v851, %v872
    %874 = vdwg.mxu0
    %875 = vmatpush.msra.mxu0 %v848
    %876 = vmatpush.msra.mxu0 %v846
    %877 = vmatpush.msra.mxu0 %v844
    %878 = vmatpush.msra.mxu0 %v842
    %879 = vmatpush.msra.mxu0 %v840
    %880 = vmatpush.msra.mxu0 %v838
    %881 = vmatpush.msra.mxu0 %v836
    %882 = vmatpush.msra.mxu0 %v834
    %883 = vmatpush.msra.mxu0 %v832
    %884 = vmatpush.msra.mxu0 %v830
    %885 = vmatpush.msra.mxu0 %v828
    %886 = vmatpush.msra.mxu0 %v826
    %887 = vmatpush.msra.mxu0 %v824
    %888 = vmatpush.msra.mxu0 %v822
    %889 = vmatpush.msra.mxu0 %v820
    %890 = vmatpush.msra.mxu0 %v818
    %891 = vmatmul.f32.gmra.mxu0 %v816
    %v892 = vpop.f32.mrf.mxu0
    %v893 = vadd.f32 %v852, %v892
    %894 = vdwg.mxu0
    %895 = vst [vmem:[#allocation20] sm:$0xff] %v873
    %896 = vst [vmem:[#allocation21] sm:$0xff] %v893
    %v897 = vld [vmem:[%s15] sm:$0xff]
    %v898 = vmul.f32 %v893, 0.5
    %v899 = vmul.f32 %v898, 1.442695
    %v900 = vpow.pop %v899
    %v901 = vmul.f32 %v897, %v900
    %v902 = vadd.f32 %v873, %v901
    %903 = vst [vmem:[#allocation23] sm:$0xff] %v902
    // Predicated region
    $region110: #{tpu_custom_call.1} parent=1 // pred_check
      _
    $region111: #{tpu_custom_call.1} parent=1 // pred_check_branch
      %905 = sbr.rel (0) target = $region113
    $region112: #{tpu_custom_call.1} parent=1 // pred_region
      %907 = vsyncadd [#allocation4], 0
      %s909 = sshll.u32 [#allocation20], 4
      %s910 = int_to_ptr.vmem [resolvable:$true] %s909
      %s911 = sshll.u32 %s16, 4
      %s912 = int_to_ptr.hbm [resolvable:$true] %s911
      %914 = dma.vmem_to_hbm [thread:$0]  %s910, 128, %s912, [#allocation4]
    $region113: #{tpu_custom_call.1} parent=1 // pred_fallthru
      _
    // Predicated region
    $region114: #{tpu_custom_call.1} parent=1 // pred_check
      _
    $region115: #{tpu_custom_call.1} parent=1 // pred_check_branch
      %916 = sbr.rel (0) target = $region117
    $region116: #{tpu_custom_call.1} parent=1 // pred_region
      %918 = vsyncadd [#allocation22], 0
      %s920 = sshll.u32 [#allocation21], 4
      %s921 = int_to_ptr.vmem [resolvable:$true] %s920
      %s922 = sshll.u32 %s17, 4
      %s923 = int_to_ptr.hbm [resolvable:$true] %s922
      %925 = dma.vmem_to_hbm [thread:$0]  %s921, 128, %s923, [#allocation22]
    $region117: #{tpu_custom_call.1} parent=1 // pred_fallthru
      _
    // Predicated region
    $region118: #{tpu_custom_call.1} parent=1 // pred_check
      _
    $region119: #{tpu_custom_call.1} parent=1 // pred_check_branch
      %927 = sbr.rel (0) target = $region121
    $region120: #{tpu_custom_call.1} parent=1 // pred_region
      %929 = vsyncadd [#allocation22], 0
      %s931 = sshll.u32 [#allocation23], 4
      %s932 = int_to_ptr.vmem [resolvable:$true] %s931
      %s933 = sshll.u32 %s18, 4
      %s934 = int_to_ptr.hbm [resolvable:$true] %s933
      %936 = dma.vmem_to_hbm [thread:$0]  %s932, 128, %s934, [#allocation22]
    $region121: #{tpu_custom_call.1} parent=1 // pred_fallthru
      _
    // Predicated region
    $region122: #{tpu_custom_call.1} parent=1 // pred_check
      _
    $region123: #{tpu_custom_call.1} parent=1 // pred_check_branch
      %938 = sbr.rel (0) target = $region125
    $region124: #{tpu_custom_call.1} parent=1 // pred_region
      %940 = dma.done [#allocation4], 128
    $region125: #{tpu_custom_call.1} parent=1 // pred_fallthru
      _
    // Predicated region
    $region126: #{tpu_custom_call.1} parent=1 // pred_check
      _
    $region127: #{tpu_custom_call.1} parent=1 // pred_check_branch
      %942 = sbr.rel (0) target = $region129
    $region128: #{tpu_custom_call.1} parent=1 // pred_region
      %944 = dma.done [#allocation22], 128
    $region129: #{tpu_custom_call.1} parent=1 // pred_fallthru
      _
    // Predicated region
    $region130: #{tpu_custom_call.1} parent=1 // pred_check
      _
    $region131: #{tpu_custom_call.1} parent=1 // pred_check_branch
      %946 = sbr.rel (0) target = $region133
    $region132: #{tpu_custom_call.1} parent=1 // pred_region
      %948 = dma.done [#allocation22], 128
    $region133: #{tpu_custom_call.1} parent=1 // pred_fallthru
      _
    %949 = vsyncpa [#allocation3], 1
    %950 = vsyncpa [#allocation6], 1
    %951 = vsyncpa [#allocation9], 1
    %952 = vsyncpa [#allocation12], 1
    %953 = vsyncpa [#allocation15], 1
    %954 = vsyncpa [#allocation18], 1
    %955 = vsyncpa [#allocation4], 1
    %956 = vsyncpa [#allocation22], 1

</llo_original>
